<compile_context>
chip_gen: v6e
topology: v6e:2x2x1
jax: 0.10.0
libtpu: 0.0.40
codegen_flags: <defaults>
</compile_context>

<pallas_src>
import functools
import math

import jax
import jax.numpy as jnp
from jax.experimental import pallas as pl
from jax.experimental.pallas import tpu as pltpu


_TARGET_TILE_BYTES = 4 * 1024 * 1024     # per streamed z buffer
_SUBLANE = 8                             # f32 rows (16 would be needed for bf16 z)


def _round_up(x, m):
    return -(-x // m) * m


def _vmem_limit_bytes():
    """Generation-aware scoped-VMEM limit: ~3/4 of physical, capped at 96 MiB
    (=> ~96 MiB on v5e/v6e's 128 MiB, ~48 MiB on v7x's 64 MiB)."""
    cap = 128 * 1024 * 1024
    try:
        cap = int(pltpu.get_tpu_info().vmem_capacity_bytes)
    except Exception:
        pass
    return int(min(cap * 3 // 4, 96 * 1024 * 1024))


def _num_tensorcores():
    """Best-effort TensorCore count (2 on v7x megacore). Falls back to 1."""
    try:
        info = pltpu.get_tpu_info()
        for name in ("num_cores", "core_count", "num_tensorcores"):
            v = getattr(info, name, None)
            if isinstance(v, int) and 1 <= v <= 8:
                return v
    except Exception:
        pass
    try:
        v = getattr(jax.devices()[0], "num_cores", None)
        if isinstance(v, int) and 1 <= v <= 8:
            return v
    except Exception:
        pass
    return 1


def _pick_tile(n_rows, stream_row_bytes, resident_bytes, budget):
    """Row tile: multiple of _SUBLANE, ~_TARGET_TILE_BYTES of streamed rows,
    halved until (double-buffered stream + resident weights) fits the budget."""
    t = max(1, _TARGET_TILE_BYTES // max(stream_row_bytes, 1))
    t = min(t, _round_up(n_rows, _SUBLANE))
    t = max(_SUBLANE, (t // _SUBLANE) * _SUBLANE)
    while t > _SUBLANE and resident_bytes + 2 * stream_row_bytes * t > budget:
        t = max(_SUBLANE, ((t // 2) // _SUBLANE) * _SUBLANE)
    return t


# ----------------------------- Pass 1 kernel ---------------------------------
def _proj_sum_kernel(z_ref, w1_ref, b1_ref, o_ref, acc_ref, *, matmul_dtype):
    """acc (1, MH) += sum_rows tanh(z_rows @ W1_blockdiag + b1_big).

    z_ref  : (tile_n, M*D)  node rows, all metapaths concatenated along lanes
    w1_ref : (M*D, M*H)     block-diagonal projection (kron(eye(M), w1))
    b1_ref : (1, M*H)       b1 tiled M times (f32)
    o_ref  : (8, M*H)       per-core partial column sum (written in epilogue)
    acc_ref: (1, M*H) VMEM  running accumulator (f32)

    The w2 contraction, the H-fold, the /N mean and the softmax all happen
    wrapper-side (w2 is row-broadcast, so it commutes with the row sum).
    """
    @pl.when(pl.program_id(1) == 0)
    def _():
        acc_ref[...] = jnp.zeros_like(acc_ref)

    zin = z_ref[...]
    if zin.dtype != matmul_dtype:
        zin = zin.astype(matmul_dtype)          # bf16 MXU path (v5e roofline)
    h = jnp.tanh(
        jnp.dot(zin, w1_ref[...], preferred_element_type=jnp.float32)
        + b1_ref[...]
    )                                           # (tile_n, MH) f32, tanh on EUP
    acc_ref[...] += jnp.sum(h, axis=0, keepdims=True)   # XLU sublane reduce

    @pl.when(pl.program_id(1) == pl.num_programs(1) - 1)
    def _():
        o_ref[...] = jnp.broadcast_to(acc_ref[...], o_ref.shape)


# ----------------------------- Pass 2 kernels --------------------------------
def _weighted_add_kernel(beta_ref, z_ref, o_ref):
    """out = sum_m beta[m] * z[:, m*D:(m+1)*D]; lane-aligned (D % 128 == 0).

    beta_ref lives in SMEM (scalar prefetch); the adds run on the VPU so this
    pass stays purely DMA-bound with no VMEM-resident weight matrix.
    """
    d = o_ref.shape[-1]
    m_count = z_ref.shape[-1] // d
    zb = z_ref[...]
    acc = beta_ref[0] * zb[:, :d].astype(jnp.float32)
    for m in range(1, m_count):
        acc = acc + beta_ref[m] * zb[:, m * d:(m + 1) * d].astype(jnp.float32)
    o_ref[...] = acc.astype(o_ref.dtype)


def _packed_matmul_kernel(zp_ref, wb_ref, o_ref):
    """out_pack = z_pack @ W_beta (beta baked into a block-diagonal matrix).

    Used only when D % 128 != 0: P nodes are packed per row so both the load
    and the store are lane-dense; the MXU is otherwise idle in this HBM-bound
    kernel, so the extra zero-FLOPs are free.
    """
    o_ref[...] = jnp.dot(
        zp_ref[...], wb_ref[...], preferred_element_type=jnp.float32
    ).astype(o_ref.dtype)


# ----------------------------- Wrapper ---------------------------------------
def semantic_attention(z, w1, b1, w2, *, pass1_bf16=False):
    """z:(N,M,D) f32, w1:(D,H), b1:(1,H), w2:(H,1) -> (N,D).

    pass1_bf16: run the pass-1 projection matmul in bf16 on the MXU
    (recommended on v5e).  It only perturbs beta through a mean+softmax;
    pass 2 always stays f32.
    """
    N, M, D = z.shape
    H = w1.shape[1]
    f32 = jnp.float32
    MD, MH = M * D, M * H
    vmem_limit = _vmem_limit_bytes()
    budget = int(vmem_limit * 0.8)
    matmul_dtype = jnp.bfloat16 if pass1_bf16 else f32
    w_itemsize = 2 if pass1_bf16 else 4

    z_flat = z.reshape(N, MD)                                  # free HBM reshape

    # ---------------- Pass 1: per-metapath mean of projected logits ----------
    w1_big = jnp.kron(jnp.eye(M, dtype=f32), w1.astype(f32)).astype(matmul_dtype)
    b1_big = jnp.tile(b1.astype(f32).reshape(1, H), (1, M))    # (1, MH) f32

    # Resident (single-buffered) weights + out block + scratch; z stream is 2x.
    # TODO(synk): for very large M*H, tile w1_big along its MH columns over an
    # extra "arbitrary" grid axis instead of only shrinking tile_n.
    resident1 = MD * MH * w_itemsize + MH * 4 + 2 * 8 * MH * 4 + 8 * MH * 4
    tile_n = _pick_tile(N, MD * 4, resident1, budget)
    n_pad1 = _round_up(N, tile_n)
    z_rows = z_flat if n_pad1 == N else jnp.pad(z_flat, ((0, n_pad1 - N), (0, 0)))
    n_steps = n_pad1 // tile_n

    cores = _num_tensorcores()
    n_par = cores if (cores > 1 and n_steps % cores == 0
                      and n_steps // cores >= 4) else 1
    n_inner = n_steps // n_par

    cost1 = pl.CostEstimate(
        flops=2 * n_pad1 * MD * MH,
        transcendentals=n_pad1 * MH,
        bytes_accessed=4 * n_pad1 * MD + MD * MH * w_itemsize + 4 * MH)

    acc = pl.pallas_call(
        functools.partial(_proj_sum_kernel, matmul_dtype=matmul_dtype),
        out_shape=jax.ShapeDtypeStruct((8 * n_par, MH), f32),
        grid_spec=pltpu.PrefetchScalarGridSpec(
            num_scalar_prefetch=0,
            grid=(n_par, n_inner),
            in_specs=[
                pl.BlockSpec((tile_n, MD), lambda p, i: (p * n_inner + i, 0)),
                pl.BlockSpec((MD, MH), lambda p, i: (0, 0),
                             pipeline_mode=pl.Buffered(1)),
                pl.BlockSpec((1, MH), lambda p, i: (0, 0),
                             pipeline_mode=pl.Buffered(1)),
            ],
            out_specs=pl.BlockSpec((8, MH), lambda p, i: (p, 0)),
            scratch_shapes=[pltpu.VMEM((1, MH), f32)],
        ),
        compiler_params=pltpu.CompilerParams(
            dimension_semantics=("parallel", "arbitrary"),
            vmem_limit_bytes=vmem_limit),
        cost_estimate=cost1,
    )(z_rows, w1_big, b1_big)

    # Tiny wrapper-side folds: combine per-core partials, remove the (exact)
    # tanh(b1) contribution of zero-padded rows, apply w2, mean over N, softmax.
    w_sum = acc[0::8].sum(axis=0)                              # (MH,)
    n_pad_rows = n_pad1 - N
    if n_pad_rows:
        w_sum = w_sum - jnp.float32(n_pad_rows) * jnp.tanh(b1_big.reshape(MH))
    w_logit = (w_sum.reshape(M, H) @ w2.astype(f32).reshape(H)) / jnp.float32(N)
    beta = jax.nn.softmax(w_logit)                             # (M,)

    # ---------------- Pass 2: out[n] = sum_m beta[m] * z[n, m, :] -------------
    if D % 128 == 0:
        # Lane-aligned VPU weighted add; beta scalars delivered via SMEM.
        tile2 = _pick_tile(N, (MD + D) * 4, 0, budget)
        n_pad2 = _round_up(N, tile2)
        z2 = z_flat if n_pad2 == N else jnp.pad(z_flat, ((0, n_pad2 - N), (0, 0)))
        cost2 = pl.CostEstimate(
            flops=2 * n_pad2 * MD,
            transcendentals=0,
            bytes_accessed=4 * n_pad2 * (MD + D) + 4 * M)
        out = pl.pallas_call(
            _weighted_add_kernel,
            out_shape=jax.ShapeDtypeStruct((n_pad2, D), z.dtype),
            grid_spec=pltpu.PrefetchScalarGridSpec(
                num_scalar_prefetch=1,
                grid=(n_pad2 // tile2,),
                in_specs=[pl.BlockSpec((tile2, MD), lambda i, b: (i, 0))],
                out_specs=pl.BlockSpec((tile2, D), lambda i, b: (i, 0)),
            ),
            compiler_params=pltpu.CompilerParams(
                dimension_semantics=("parallel",),
                vmem_limit_bytes=vmem_limit),
            cost_estimate=cost2,
        )(beta, z2)
        return out[:N]

    # D < 128 (or not lane-aligned): pack P nodes per row so loads AND stores
    # are lane-dense; pad N up to a multiple of P instead of masked stores.
    P = 128 // math.gcd(D, 128)
    PMD, PD = P * MD, P * D
    resident2 = PMD * PD * 4                                  # W_beta, Buffered(1)
    tile_g = _pick_tile(_round_up(N, P) // P, (PMD + PD) * 4, resident2, budget)
    g_pad = _round_up(_round_up(N, P) // P, tile_g)
    n_pad2 = g_pad * P
    z_rows2 = z_flat if n_pad2 == N else jnp.pad(z_flat, ((0, n_pad2 - N), (0, 0)))
    z_pack = z_rows2.reshape(g_pad, PMD)                      # free HBM reshape
    # W_beta[(p*M+m)*D + d, p*D + d'] = beta[m] * (d == d') * (p == p')
    w_beta = jnp.kron(
        jnp.eye(P, dtype=f32),
        jnp.kron(beta.reshape(M, 1), jnp.eye(D, dtype=f32)),
    )                                                         # (PMD, PD)
    cost2 = pl.CostEstimate(
        flops=2 * g_pad * PMD * PD,
        transcendentals=0,
        bytes_accessed=4 * g_pad * (PMD + PD) + 4 * PMD * PD)

    out_pack = pl.pallas_call(
        _packed_matmul_kernel,
        out_shape=jax.ShapeDtypeStruct((g_pad, PD), z.dtype),
        grid_spec=pltpu.PrefetchScalarGridSpec(
            num_scalar_prefetch=0,
            grid=(g_pad // tile_g,),
            in_specs=[
                pl.BlockSpec((tile_g, PMD), lambda i: (i, 0)),
                pl.BlockSpec((PMD, PD), lambda i: (0, 0),
                             pipeline_mode=pl.Buffered(1)),
            ],
            out_specs=pl.BlockSpec((tile_g, PD), lambda i: (i, 0)),
        ),
        compiler_params=pltpu.CompilerParams(
            dimension_semantics=("parallel",),
            vmem_limit_bytes=vmem_limit),
        cost_estimate=cost2,
    )(z_pack, w_beta)

    return out_pack.reshape(n_pad2, D)[:N]


def reference(z, w1, b1, w2):
    h = jnp.tanh(jnp.einsum("nmd,dh->nmh", z, w1) + b1)        # (N, M, H)
    w = jnp.einsum("nmh,hk->nmk", h, w2)                       # (N, M, 1)
    wm = jnp.mean(w, axis=0)                                   # (M, 1)
    beta = jax.nn.softmax(wm, axis=0)                          # (M, 1)
    return jnp.sum(beta[None, :, :] * z, axis=1)               # (N, D)


if __name__ == "__main__":
    # nodes, metapaths, in_size, hidden_size (small, consistent with the module)
    N, M, D, H = 16, 4, 32, 32
    key = jax.random.PRNGKey(0)
    kz, k1, kb, k2 = jax.random.split(key, 4)

    z = jax.random.normal(kz, (N, M, D), dtype=jnp.float32)
    # Deterministic synthetic parameter init (module shapes; not a checkpoint).
    w1 = jax.random.normal(k1, (D, H), dtype=jnp.float32) * (1.0 / jnp.sqrt(D))
    b1 = jax.random.normal(kb, (1, H), dtype=jnp.float32) * 0.01
    w2 = jax.random.normal(k2, (H, 1), dtype=jnp.float32) * (1.0 / jnp.sqrt(H))

    ref = reference(z, w1, b1, w2)

    # Exact-semantics f32 path (packed-matmul pass 2, since D=32 < 128).
    out = jax.block_until_ready(semantic_attention(z, w1, b1, w2))
    assert out.shape == (N, D)
    assert jnp.allclose(out, ref, atol=1e-5, rtol=1e-5), float(
        jnp.max(jnp.abs(out - ref)))

    # bf16 pass-1 MXU path (v5e optimization): only beta is perturbed.
    out_bf16 = jax.block_until_ready(
        semantic_attention(z, w1, b1, w2, pass1_bf16=True))
    assert jnp.allclose(out_bf16, ref, atol=5e-2, rtol=5e-2), float(
        jnp.max(jnp.abs(out_bf16 - ref)))

    # Non-multiple-of-8 N and lane-aligned D: exercises the wrapper-side row
    # padding (with exact tanh(b1) correction) and the VPU weighted-add pass 2.
    N2, D2 = 21, 128
    z2 = jax.random.normal(kz, (N2, M, D2), dtype=jnp.float32)
    w1b = jax.random.normal(k1, (D2, H), dtype=jnp.float32) * (1.0 / jnp.sqrt(D2))
    out2 = jax.block_until_ready(semantic_attention(z2, w1b, b1, w2))
    ref2 = reference(z2, w1b, b1, w2)
    assert out2.shape == (N2, D2)
    assert jnp.allclose(out2, ref2, atol=1e-5, rtol=1e-5), float(
        jnp.max(jnp.abs(out2 - ref2)))

    print("KERNEL_OK")
</pallas_src>

<mosaic_0001>
module attributes {stable_mosaic.version = 11 : i64} {
  func.func @_proj_sum_kernel(%arg0: i32, %arg1: i32, %arg2: memref<16x128xf32, #tpu.memory_space<vmem>>, %arg3: memref<128x128xf32, #tpu.memory_space<vmem>>, %arg4: memref<1x128xf32, #tpu.memory_space<vmem>>, %arg5: memref<8x128xf32, #tpu.memory_space<vmem>>, %arg6: memref<1x128xf32, #tpu.memory_space<vmem>>) attributes {dimension_semantics = [#tpu.dimension_semantics<parallel>, #tpu.dimension_semantics<arbitrary>], iteration_bounds = array<i64: 1, 1>, scalar_prefetch = 0 : i64, scratch_operands = 1 : i64, tpu.core_type = #tpu.core_type<tc>, window_params = [{transform_indices = @transform_0, window_bounds = array<i64: 16, 128>}, {pipeline_mode = #tpu.pipeline_mode<synchronous>, transform_indices = @transform_1, window_bounds = array<i64: 128, 128>}, {pipeline_mode = #tpu.pipeline_mode<synchronous>, transform_indices = @transform_2, window_bounds = array<i64: 1, 128>}, {transform_indices = @transform_3, window_bounds = array<i64: 8, 128>}]} {
    %c0_i32 = arith.constant 0 : i32
    %0 = arith.cmpi eq, %arg1, %c0_i32 : i32
    %1 = arith.extui %0 : i1 to i32
    %c0_i32_0 = arith.constant 0 : i32
    %2 = arith.cmpi ne, %1, %c0_i32_0 : i32
    scf.if %2 {
      %cst_13 = arith.constant 0.000000e+00 : f32
      %18 = vector.broadcast %cst_13 : f32 to vector<1x128xf32>
      %c0_14 = arith.constant 0 : index
      %c0_15 = arith.constant 0 : index
      %19 = vector.load %arg6[%c0_14, %c0_15] : memref<1x128xf32, #tpu.memory_space<vmem>>, vector<1x128xf32>
      tpu.vector_store %arg6[%c0_14, %c0_15], %18 {strides = array<i32>} : memref<1x128xf32, #tpu.memory_space<vmem>>, vector<1x128xf32>,
    } else {
    }
    %c0 = arith.constant 0 : index
    %c0_1 = arith.constant 0 : index
    %3 = vector.load %arg2[%c0, %c0_1] : memref<16x128xf32, #tpu.memory_space<vmem>>, vector<16x128xf32>
    %c0_2 = arith.constant 0 : index
    %c0_3 = arith.constant 0 : index
    %4 = vector.load %arg3[%c0_2, %c0_3] : memref<128x128xf32, #tpu.memory_space<vmem>>, vector<128x128xf32>
    %cst = arith.constant dense<0.000000e+00> : vector<16x128xf32>
    %5 = tpu.matmul %3, %4, %cst {dimension_numbers = #tpu.dot_dimension_numbers<[1], [0], [0], [1], [0, 0, 1, 1], [], []>} : vector<16x128xf32>, vector<128x128xf32>, vector<16x128xf32> -> vector<16x128xf32>
    %c0_4 = arith.constant 0 : index
    %c0_5 = arith.constant 0 : index
    %6 = vector.load %arg4[%c0_4, %c0_5] : memref<1x128xf32, #tpu.memory_space<vmem>>, vector<1x128xf32>
    %7 = vector.broadcast %6 : vector<1x128xf32> to vector<16x128xf32>
    %8 = arith.addf %5, %7 : vector<16x128xf32>
    %9 = math.tanh %8 : vector<16x128xf32>
    %c0_6 = arith.constant 0 : index
    %c0_7 = arith.constant 0 : index
    %10 = vector.load %arg6[%c0_6, %c0_7] : memref<1x128xf32, #tpu.memory_space<vmem>>, vector<1x128xf32>
    %cst_8 = arith.constant dense<0.000000e+00> : vector<128xf32>
    %11 = vector.multi_reduction <add>, %9, %cst_8 [0] : vector<16x128xf32> to vector<128xf32>
    %12 = vector.shape_cast %11 : vector<128xf32> to vector<1x128xf32>
    %13 = arith.addf %10, %12 : vector<1x128xf32>
    %c0_9 = arith.constant 0 : index
    %c0_10 = arith.constant 0 : index
    %14 = vector.load %arg6[%c0_9, %c0_10] : memref<1x128xf32, #tpu.memory_space<vmem>>, vector<1x128xf32>
    tpu.vector_store %arg6[%c0_9, %c0_10], %13 {strides = array<i32>} : memref<1x128xf32, #tpu.memory_space<vmem>>, vector<1x128xf32>,
    %c0_i32_11 = arith.constant 0 : i32
    %15 = arith.cmpi eq, %arg1, %c0_i32_11 : i32
    %16 = arith.extui %15 : i1 to i32
    %c0_i32_12 = arith.constant 0 : i32
    %17 = arith.cmpi ne, %16, %c0_i32_12 : i32
    scf.if %17 {
      %c0_13 = arith.constant 0 : index
      %c0_14 = arith.constant 0 : index
      %18 = vector.load %arg6[%c0_13, %c0_14] : memref<1x128xf32, #tpu.memory_space<vmem>>, vector<1x128xf32>
      %19 = vector.shape_cast %18 : vector<1x128xf32> to vector<1x128xf32>
      %20 = vector.broadcast %19 : vector<1x128xf32> to vector<8x128xf32>
      %c0_15 = arith.constant 0 : index
      %c0_16 = arith.constant 0 : index
      %21 = vector.load %arg5[%c0_15, %c0_16] : memref<8x128xf32, #tpu.memory_space<vmem>>, vector<8x128xf32>
      tpu.vector_store %arg5[%c0_15, %c0_16], %20 {strides = array<i32>} : memref<8x128xf32, #tpu.memory_space<vmem>>, vector<8x128xf32>,
    } else {
    }
    return
  }
  func.func @transform_0(%arg0: i32, %arg1: i32) -> (i32, i32) {
    %c1_i32 = arith.constant 1 : i32
    %0 = arith.muli %arg0, %c1_i32 : i32
    %1 = arith.addi %0, %arg1 : i32
    %c0_i32 = arith.constant 0 : i32
    %c0_i32_0 = arith.constant 0 : i32
    return %1, %c0_i32 : i32, i32
  }
  func.func @transform_1(%arg0: i32, %arg1: i32) -> (i32, i32) {
    %c0_i32 = arith.constant 0 : i32
    %c0_i32_0 = arith.constant 0 : i32
    %c0_i32_1 = arith.constant 0 : i32
    return %c0_i32, %c0_i32_0 : i32, i32
  }
  func.func @transform_2(%arg0: i32, %arg1: i32) -> (i32, i32) {
    %c0_i32 = arith.constant 0 : i32
    %c0_i32_0 = arith.constant 0 : i32
    %c0_i32_1 = arith.constant 0 : i32
    return %c0_i32, %c0_i32_0 : i32, i32
  }
  func.func @transform_3(%arg0: i32, %arg1: i32) -> (i32, i32) {
    %c0_i32 = arith.constant 0 : i32
    %c0_i32_0 = arith.constant 0 : i32
    return %arg0, %c0_i32 : i32, i32
  }
}

</mosaic_0001>

<llo_original>
// kernel: tpu_custom_call.1
$region0: #{tpu_custom_call.1}
  #allocation0 [shape = 'u32[]', space=smem, size = 0x4, offset = 0x4, fixed_abs, tag = 'smem constant byte address 0x4 - core index']
  #allocation1 [shape = 'u32[144,128]{1,0:T(1,128)}', space=vmem, size = 0x12000, scoped, tag = 'internal scratch']
  #allocation2 [shape = 'f32[1,128]{1,0:T(1,128)}', space=vmem, size = 0x200, scoped, tag = 'scratch operand']
  %s0 = inlined_call_operand.hbm [shape: f32[16,128], index: 0, kind: input, shape index: {}]
  %s1 = inlined_call_operand.hbm [shape: f32[128,128], index: 1, kind: input, shape index: {}]
  %s2 = inlined_call_operand.vmem [shape: f32[1,128], index: 2, kind: input, shape index: {}]
  %s3 = inlined_call_operand.hbm [shape: f32[8,128], index: 3, kind: output, shape index: {}]
  %s4 = sld [smem:[#allocation0]]
  $region38: #{tpu_custom_call.1} parent=0
    _
  %s6 = ssub.s32 1, %s4
  %s7 = scalar_select 0, %s6, %s4
  $region1: #{tpu_custom_call.1} parent=0
    #allocation3 [shape = 'u8[8192]{0}', space=vmem, size = 0x2000, scoped, tag = 'input window, operand 0, single buffered']
    #allocation4 [shape = 's32[1]{0}', space=sflag, size = 0x4, scoped, tag = 'scoped memory for tpu_custom_call.1']
    #allocation5 [shape = 's32[1]{0}', space=sflag, size = 0x4, scoped, tag = 'scoped memory for tpu_custom_call.1']
    #allocation6 [shape = 'u8[65536]{0}', space=vmem, size = 0x10000, scoped, tag = 'input window, operand 1, single buffered']
    #allocation7 [shape = 's32[1]{0}', space=sflag, size = 0x4, scoped, tag = 'scoped memory for tpu_custom_call.1']
    #allocation8 [shape = 'u8[4096]{0}', space=vmem, size = 0x1000, scoped, tag = 'output window, operand 0, single buffered']
    %8 = vsyncpa [#allocation4], 0
    %9 = vsyncpa [#allocation7], 0
    %10 = vsyncpa [#allocation5], 0
    // Predicated region
    $region2: #{tpu_custom_call.1} parent=1 // pred_check
      _
    $region3: #{tpu_custom_call.1} parent=1 // pred_check_branch
      %12 = sbr.rel (0) target = $region5
    $region4: #{tpu_custom_call.1} parent=1 // pred_region
      %s13 = sadd.s32 0, 0
      %s14 = smul.u32 2, %s13
      %s16 = ssub.s32 256, 256
      %17 = vsyncadd [#allocation4], %s16
      %s18 = smul.addr %s14, 128
      %s19 = scalar_lea.hbm %s0, %s18
      %s20 = sshll.u32 [#allocation3], 4
      %s21 = int_to_ptr.vmem [resolvable:$true] %s20
      %26 = dma.hbm_to_vmem [thread:$0]  %s19, 256, %s21, [#allocation4], 128, 128, 8
    $region5: #{tpu_custom_call.1} parent=1 // pred_fallthru
      _
    // Predicated region
    $region6: #{tpu_custom_call.1} parent=1 // pred_check
      _
    $region7: #{tpu_custom_call.1} parent=1 // pred_check_branch
      %28 = sbr.rel (0) target = $region9
    $region8: #{tpu_custom_call.1} parent=1 // pred_region
      %s30 = ssub.s32 2048, 2048
      %31 = vsyncadd [#allocation7], %s30
      %s32 = sshll.u32 [#allocation6], 4
      %s33 = int_to_ptr.vmem [resolvable:$true] %s32
      %38 = dma.hbm_to_vmem [thread:$0]  %s1, 2048, %s33, [#allocation7], 128, 128, 8
    $region9: #{tpu_custom_call.1} parent=1 // pred_fallthru
      _
    // Predicated region
    $region10: #{tpu_custom_call.1} parent=1 // pred_check
      _
    $region11: #{tpu_custom_call.1} parent=1 // pred_check_branch
      %40 = sbr.rel (0) target = $region13
    $region12: #{tpu_custom_call.1} parent=1 // pred_region
      _
    $region13: #{tpu_custom_call.1} parent=1 // pred_fallthru
      _
    // Predicated region
    $region14: #{tpu_custom_call.1} parent=1 // pred_check
      _
    $region15: #{tpu_custom_call.1} parent=1 // pred_check_branch
      %42 = sbr.rel (0) target = $region17
    $region16: #{tpu_custom_call.1} parent=1 // pred_region
      %43 = dma.done [#allocation4], 256
    $region17: #{tpu_custom_call.1} parent=1 // pred_fallthru
      _
    // Predicated region
    $region18: #{tpu_custom_call.1} parent=1 // pred_check
      _
    $region19: #{tpu_custom_call.1} parent=1 // pred_check_branch
      %45 = sbr.rel (0) target = $region21
    $region20: #{tpu_custom_call.1} parent=1 // pred_region
      %46 = dma.done [#allocation7], 2048
    $region21: #{tpu_custom_call.1} parent=1 // pred_fallthru
      _
    %s47 = sadd.s32 0, 0
    %s48 = smul.u32 2, %s47
    %p49 = scmp.eq.s32.totalorder 0, 0
    // Predicated region
    $region22: #{tpu_custom_call.1} parent=1 // pred_check
      %p50 = pneg %p49
    $region23: #{tpu_custom_call.1} parent=1 // pred_check_branch
      %52 = sbr.rel (%p50) target = $region25
    $region24: #{tpu_custom_call.1} parent=1 // pred_region
      %53 = vst [vmem:[#allocation2] sm:$0x1] 0.0
    $region25: #{tpu_custom_call.1} parent=1 // pred_fallthru
      _
    %v54 = vld [vmem:[#allocation3] sm:$0xff]
    %v55 = vld [vmem:[#allocation3 + $0x8] sm:$0xff]
    %v56 = vld [vmem:[#allocation6] sm:$0xff]
    %v57 = vld [vmem:[#allocation6 + $0x8] sm:$0xff]
    %v58 = vld [vmem:[#allocation6 + $0x10] sm:$0xff]
    %v59 = vld [vmem:[#allocation6 + $0x18] sm:$0xff]
    %v60 = vld [vmem:[#allocation6 + $0x20] sm:$0xff]
    %v61 = vld [vmem:[#allocation6 + $0x28] sm:$0xff]
    %v62 = vld [vmem:[#allocation6 + $0x30] sm:$0xff]
    %v63 = vld [vmem:[#allocation6 + $0x38] sm:$0xff]
    %v64 = vld [vmem:[#allocation6 + $0x40] sm:$0xff]
    %v65 = vld [vmem:[#allocation6 + $0x48] sm:$0xff]
    %v66 = vld [vmem:[#allocation6 + $0x50] sm:$0xff]
    %v67 = vld [vmem:[#allocation6 + $0x58] sm:$0xff]
    %v68 = vld [vmem:[#allocation6 + $0x60] sm:$0xff]
    %v69 = vld [vmem:[#allocation6 + $0x68] sm:$0xff]
    %v70 = vld [vmem:[#allocation6 + $0x70] sm:$0xff]
    %v71 = vld [vmem:[#allocation6 + $0x78] sm:$0xff]
    %v72 = vld [vmem:[%s2] sm:$0x1]
    %v74 = vlaneseq
    %v75 = vshrl.u32 %v74, 7
    %v76 = vsub.s32 0, %v75
    %v77 = vrot.slane %v72, %v76
    %79 = vmatprep.subr.mxu0 0.0
    %80 = vmatpush1.msra.mxu0 %v71
    %81 = vmatprep.subr.mxu0 0.0
    %82 = vmatpush1.msra.mxu0 %v70
    %83 = vmatprep.subr.mxu0 0.0
    %84 = vmatpush1.msra.mxu0 %v69
    %85 = vmatprep.subr.mxu0 0.0
    %86 = vmatpush1.msra.mxu0 %v68
    %87 = vmatprep.subr.mxu0 0.0
    %88 = vmatpush1.msra.mxu0 %v67
    %89 = vmatprep.subr.mxu0 0.0
    %90 = vmatpush1.msra.mxu0 %v66
    %91 = vmatprep.subr.mxu0 0.0
    %92 = vmatpush1.msra.mxu0 %v65
    %93 = vmatprep.subr.mxu0 0.0
    %94 = vmatpush1.msra.mxu0 %v64
    %95 = vmatprep.subr.mxu0 0.0
    %96 = vmatpush1.msra.mxu0 %v63
    %97 = vmatprep.subr.mxu0 0.0
    %98 = vmatpush1.msra.mxu0 %v62
    %99 = vmatprep.subr.mxu0 0.0
    %100 = vmatpush1.msra.mxu0 %v61
    %101 = vmatprep.subr.mxu0 0.0
    %102 = vmatpush1.msra.mxu0 %v60
    %103 = vmatprep.subr.mxu0 0.0
    %104 = vmatpush1.msra.mxu0 %v59
    %105 = vmatprep.subr.mxu0 0.0
    %106 = vmatpush1.msra.mxu0 %v58
    %107 = vmatprep.subr.mxu0 0.0
    %108 = vmatpush1.msra.mxu0 %v57
    %109 = vmatprep.subr.mxu0 0.0
    %110 = vmatpush1.msra.mxu0 %v56
    %111 = vmatprep.subr.mxu0 0.0
    %112 = vmatpush2.msra.mxu0 0.0
    %113 = vmatprep.subr.mxu0 0.0
    %114 = vmatpush2.msra.mxu0 0.0
    %115 = vmatprep.subr.mxu0 0.0
    %116 = vmatpush2.msra.mxu0 0.0
    %117 = vmatprep.subr.mxu0 0.0
    %118 = vmatpush2.msra.mxu0 0.0
    %119 = vmatprep.subr.mxu0 0.0
    %120 = vmatpush2.msra.mxu0 0.0
    %121 = vmatprep.subr.mxu0 0.0
    %122 = vmatpush2.msra.mxu0 0.0
    %123 = vmatprep.subr.mxu0 0.0
    %124 = vmatpush2.msra.mxu0 0.0
    %125 = vmatprep.subr.mxu0 0.0
    %126 = vmatpush2.msra.mxu0 0.0
    %127 = vmatprep.subr.mxu0 0.0
    %128 = vmatpush2.msra.mxu0 0.0
    %129 = vmatprep.subr.mxu0 0.0
    %130 = vmatpush2.msra.mxu0 0.0
    %131 = vmatprep.subr.mxu0 0.0
    %132 = vmatpush2.msra.mxu0 0.0
    %133 = vmatprep.subr.mxu0 0.0
    %134 = vmatpush2.msra.mxu0 0.0
    %135 = vmatprep.subr.mxu0 0.0
    %136 = vmatpush2.msra.mxu0 0.0
    %137 = vmatprep.subr.mxu0 0.0
    %138 = vmatpush2.msra.mxu0 0.0
    %139 = vmatprep.subr.mxu0 0.0
    %140 = vmatpush2.msra.mxu0 0.0
    %141 = vmatprep.subr.mxu0 0.0
    %142 = vmatpush2.msra.mxu0 0.0
    %143 = vmatprep.mubr.f32.mxu0 0.0
    %144 = vmatmul.mubr.f32.gmra.mxu0 %v54
    %v145 = vpop.f32.mrf.mxu0
    %v146 = vadd.f32 %v77, %v145
    %v147 = vpop.f32.mrf.mxu0
    %148 = vmatprep.mubr.f32.mxu0 0.0
    %149 = vmatmul.mubr.f32.gmra.mxu0 %v55
    %v150 = vpop.f32.mrf.mxu0
    %v151 = vadd.f32 %v77, %v150
    %v152 = vpop.f32.mrf.mxu0
    %153 = vdwg.mxu0
    %v154 = vtanh.pop %v146
    %v155 = vtanh.pop %v151
    %v156 = vld [vmem:[#allocation2] sm:$0x1]
    %v157 = vadd.f32 %v154, %v155
    %v158 = vrot.slane %v157, 4
    %v159 = vadd.f32 %v157, %v158
    %v160 = vrot.slane %v159, 2
    %v161 = vadd.f32 %v159, %v160
    %v162 = vrot.slane %v161, 1
    %v163 = vadd.f32 %v161, %v162
    %v164 = vadd.f32 %v156, %v163
    %165 = vst [vmem:[#allocation2] sm:$0x1] %v164
    // Predicated region
    $region26: #{tpu_custom_call.1} parent=1 // pred_check
      %p166 = pneg %p49
    $region27: #{tpu_custom_call.1} parent=1 // pred_check_branch
      %168 = sbr.rel (%p166) target = $region29
    $region28: #{tpu_custom_call.1} parent=1 // pred_region
      %v169 = vld [vmem:[#allocation2] sm:$0x1]
      %v171 = vlaneseq
      %v172 = vshrl.u32 %v171, 7
      %v173 = vsub.s32 0, %v172
      %v174 = vrot.slane %v169, %v173
      %176 = vst [vmem:[#allocation8] sm:$0xff] %v174
    $region29: #{tpu_custom_call.1} parent=1 // pred_fallthru
      _
    // Predicated region
    $region30: #{tpu_custom_call.1} parent=1 // pred_check
      _
    $region31: #{tpu_custom_call.1} parent=1 // pred_check_branch
      %178 = sbr.rel (0) target = $region33
    $region32: #{tpu_custom_call.1} parent=1 // pred_region
      %s180 = ssub.s32 128, 128
      %181 = vsyncadd [#allocation5], %s180
      %s183 = sshll.u32 [#allocation8], 4
      %s184 = int_to_ptr.vmem [resolvable:$true] %s183
      %186 = dma.vmem_to_hbm [thread:$0]  %s184, 128, %s3, [#allocation5]
    $region33: #{tpu_custom_call.1} parent=1 // pred_fallthru
      _
    // Predicated region
    $region34: #{tpu_custom_call.1} parent=1 // pred_check
      _
    $region35: #{tpu_custom_call.1} parent=1 // pred_check_branch
      %188 = sbr.rel (0) target = $region37
    $region36: #{tpu_custom_call.1} parent=1 // pred_region
      %189 = dma.done [#allocation5], 128
    $region37: #{tpu_custom_call.1} parent=1 // pred_fallthru
      _
    %190 = vsyncpa [#allocation4], 1
    %191 = vsyncpa [#allocation7], 1
    %192 = vsyncpa [#allocation5], 1

</llo_original>
